<compile_context>
chip_gen: v7x
topology: tpu7x:2x2x1
jax: 0.10.0
libtpu: 0.0.40
codegen_flags: <defaults>
</compile_context>

<pallas_src>
import functools

import jax
import jax.numpy as jnp
import numpy as np
from jax.experimental import pallas as pl
from jax.experimental.pallas import tpu as pltpu

_LANE = 128
_SUBLANE = 8


def _round_up(v, m):
    return (v + m - 1) // m * m


def _cdiv(a, b):
    return (a + b - 1) // b


def _tpu_hw_info():
    """(physical VMEM bytes per TensorCore, TensorCores per chip), with fallbacks."""
    kind = ""
    try:
        kind = jax.devices()[0].device_kind.lower()
    except Exception:
        pass
    vmem_cap = None
    try:
        vmem_cap = int(pltpu.get_tpu_info().vmem_capacity_bytes)
    except Exception:
        pass
    if not vmem_cap or vmem_cap <= 0:
        if "v7" in kind:
            vmem_cap = 64 << 20
        elif kind:
            vmem_cap = 128 << 20          # v5e / v6e
        else:
            vmem_cap = 64 << 20           # undetectable: be conservative
    num_tc = 2 if ("v7" in kind or vmem_cap <= (64 << 20)) else 1
    return vmem_cap, num_tc


def _choose_batch_tile(batch, per_batch_bytes, slab_budget_bytes, num_tc):
    """Largest batch tile fitting the slab budget, preferring >=4 grid steps
    (and an even step count on dual-TensorCore chips) and divisor tiles."""
    max_fit = max(1, min(batch, int(slab_budget_bytes) // max(int(per_batch_bytes), 1)))
    target_steps = min(batch, max(4, 2 * num_tc))
    best_bt, best_score = 1, None
    for bt in range(1, max_fit + 1):
        steps = _cdiv(batch, bt)
        score = (
            steps >= target_steps,                   # pipeline depth / keep both cores busy
            num_tc == 1 or steps % num_tc == 0,      # even split across TensorCores (v7x)
            batch % bt == 0,                         # avoid a ragged edge block if possible
            bt,                                      # then as large as possible
        )
        if best_score is None or score > best_score:
            best_bt, best_score = bt, score
    return best_bt


# ---------------------------------------------------------------------------
# Kernels
# ---------------------------------------------------------------------------

def _se_fused_kernel(x_ref, w1t_ref, b1_ref, w2t_ref, b2_ref, o_ref, *, inv_t):
    # x_ref: (Bt, C, T) in native dtype; mean over T with f32 accumulation.
    s = jnp.sum(x_ref[...], axis=-1, dtype=jnp.float32) * inv_t            # (Bt, C)
    h = jnp.dot(s, w1t_ref[...], preferred_element_type=jnp.float32) + b1_ref[...]
    h = jnp.maximum(h, 0.0)                                                # (Bt, BN)
    g = jnp.dot(h, w2t_ref[...], preferred_element_type=jnp.float32) + b2_ref[...]
    g = jax.nn.sigmoid(g)                                                  # (Bt, C)
    # One tiny relayout of the gate (C: lanes -> sublanes) per batch tile; the
    # streaming multiply is then a lane-broadcast in the input dtype.
    gate = g[:, :, None].astype(o_ref.dtype)                               # (Bt, C, 1)
    o_ref[...] = (x_ref[...] * gate).astype(o_ref.dtype)


def _se_gate_kernel(x_ref, w1t_ref, b1_ref, w2t_ref, b2_ref, g_ref, acc_ref, *,
                    inv_t, t_total, t_tile, mask_tail):
    ti = pl.program_id(1)

    @pl.when(ti == 0)
    def _():
        acc_ref[...] = jnp.zeros_like(acc_ref)

    xt = x_ref[...]
    if mask_tail:
        # The grid over-covers T; zero the out-of-range lanes of the tail tile
        # (edge-block reads past the array end have unspecified contents).
        col = jax.lax.broadcasted_iota(jnp.int32, xt.shape, 2) + ti * t_tile
        xt = jnp.where(col < t_total, xt, jnp.zeros_like(xt))
    acc_ref[...] += jnp.sum(xt, axis=-1, dtype=jnp.float32)                # (Bt, C)

    @pl.when(ti == pl.num_programs(1) - 1)
    def _():
        s = acc_ref[...] * inv_t
        h = jnp.dot(s, w1t_ref[...], preferred_element_type=jnp.float32) + b1_ref[...]
        h = jnp.maximum(h, 0.0)
        g = jax.nn.sigmoid(
            jnp.dot(h, w2t_ref[...], preferred_element_type=jnp.float32) + b2_ref[...])
        g_ref[...] = g[:, :, None]                                         # (Bt, C, 1) f32


def _se_scale_kernel(x_ref, g_ref, o_ref):
    # Pure streaming scale: native-dtype multiply, lane-broadcast of the gate.
    o_ref[...] = (x_ref[...] * g_ref[...].astype(o_ref.dtype)).astype(o_ref.dtype)


# ---------------------------------------------------------------------------
# Wrapper
# ---------------------------------------------------------------------------

def se_module(x, w1, b1, w2, b2, *, slab_target_bytes=None, vmem_limit_bytes=None):
    """SE forward.  x: (B, C, T); w1: (BN, C, 1); b1: (BN,); w2: (C, BN, 1); b2: (C,)."""
    B, C, T = x.shape
    BN = w1.shape[0]
    itemsize = jnp.dtype(x.dtype).itemsize

    # 1x1 Conv1d weights as matmul operands; gate math stays in f32.
    w1t = jnp.transpose(w1[:, :, 0]).astype(jnp.float32)   # (C, BN)
    w2t = jnp.transpose(w2[:, :, 0]).astype(jnp.float32)   # (BN, C)
    b1r = b1.reshape(1, BN).astype(jnp.float32)
    b2r = b2.reshape(1, C).astype(jnp.float32)
    inv_t = 1.0 / float(T)

    vmem_cap, num_tc = _tpu_hw_info()
    if vmem_limit_bytes is None:
        # ~1/8 headroom below physical VMEM: 56 MiB on v7x (64 MiB physical),
        # 112 MiB on v5e/v6e (128 MiB).  Always explicit (v5e default is 16 MiB).
        vmem_limit_bytes = max(32 << 20, (vmem_cap // 8) * 7)
    weight_bytes = 4 * (2 * C * BN + C + BN)                # f32 W1^T, W2^T, b1, b2
    if slab_target_bytes is None:
        # BlockSpec double-buffers both the x slab and the out slab (4 slabs
        # live), plus double-buffered weights and a small scratch margin.
        slab_target_bytes = max(
            _LANE * _LANE * itemsize,
            (int(vmem_limit_bytes) - 2 * weight_bytes - (4 << 20)) // 4)

    # VMEM footprint of one batch row's (C, T) tile (lane/sublane rounded).
    per_batch_bytes = _round_up(C, _SUBLANE) * _round_up(T, _LANE) * itemsize
    fused = per_batch_bytes <= slab_target_bytes

    weight_specs = [
        pl.BlockSpec((C, BN), lambda *_: (0, 0)),   # W1^T (replicated)
        pl.BlockSpec((1, BN), lambda *_: (0, 0)),   # b1
        pl.BlockSpec((BN, C), lambda *_: (0, 0)),   # W2^T (replicated)
        pl.BlockSpec((1, C), lambda *_: (0, 0)),    # b2
    ]

    if fused:
        # Single pass over HBM (1 read + 1 write of x).  Full-T blocks: ragged
        # T needs no pad/slice round-trip, only masked tail stores.
        Bt = _choose_batch_tile(B, per_batch_bytes, slab_target_bytes, num_tc)
        nb = _cdiv(B, Bt)
        out = pl.pallas_call(
            functools.partial(_se_fused_kernel, inv_t=inv_t),
            out_shape=jax.ShapeDtypeStruct((B, C, T), x.dtype),
            grid_spec=pltpu.PrefetchScalarGridSpec(
                num_scalar_prefetch=0,
                grid=(nb,),
                in_specs=[pl.BlockSpec((Bt, C, T), lambda b: (b, 0, 0))] + weight_specs,
                out_specs=pl.BlockSpec((Bt, C, T), lambda b: (b, 0, 0)),
            ),
            compiler_params=pltpu.CompilerParams(
                dimension_semantics=("parallel",),
                vmem_limit_bytes=int(vmem_limit_bytes),
            ),
            cost_estimate=pl.CostEstimate(
                flops=4 * B * C * BN + 2 * B * C * T,
                transcendentals=B * C,
                bytes_accessed=2 * B * C * T * itemsize + weight_bytes,
            ),
        )(x, w1t, b1r, w2t, b2r)
        return out

    # Two-pass reduce-then-scale (3 HBM passes over x): only when even a single
    # batch row's (C, T) slab exceeds the VMEM-derived budget.
    # Largest 128-multiple T tile whose (1, C, Tt) slab fits the budget.
    Tt = max(_LANE,
             (int(slab_target_bytes) // (_round_up(C, _SUBLANE) * itemsize))
             // _LANE * _LANE)
    Tt = min(Tt, _round_up(T, _LANE))
    n_t = _cdiv(T, Tt)
    mask_tail = (T % Tt) != 0
    Bt = 1  # a single batch row already exceeds the slab budget here

    # Pass 1: T-tiled reduction -> per-batch gate (B, C, 1), C on sublanes.
    gate = pl.pallas_call(
        functools.partial(_se_gate_kernel, inv_t=inv_t, t_total=T, t_tile=Tt,
                          mask_tail=mask_tail),
        out_shape=jax.ShapeDtypeStruct((B, C, 1), jnp.float32),
        grid_spec=pltpu.PrefetchScalarGridSpec(
            num_scalar_prefetch=0,
            grid=(B, n_t),
            in_specs=[pl.BlockSpec((Bt, C, Tt), lambda b, t: (b, 0, t))] + weight_specs,
            out_specs=pl.BlockSpec((Bt, C, 1), lambda b, t: (b, 0, 0)),
            scratch_shapes=[pltpu.VMEM((Bt, C), jnp.float32)],
        ),
        compiler_params=pltpu.CompilerParams(
            dimension_semantics=("parallel", "arbitrary"),
            vmem_limit_bytes=int(vmem_limit_bytes),
        ),
        cost_estimate=pl.CostEstimate(
            flops=4 * B * C * BN + B * C * T,
            transcendentals=B * C,
            bytes_accessed=B * C * T * itemsize + B * C * 4 + weight_bytes,
        ),
    )(x, w1t, b1r, w2t, b2r)

    # Pass 2: pure streaming scale with lane-dense (128-multiple) tiles; the
    # partial tail-tile stores are dropped by Pallas automatically.
    # NOTE: pipeline_mode=pl.Buffered(3) on the x spec is a possible few-%
    # win if a profile shows exposed DMA; kept at the default double-buffer so
    # the VMEM budget above stays valid on v7x's 64 MiB.
    out = pl.pallas_call(
        _se_scale_kernel,
        out_shape=jax.ShapeDtypeStruct((B, C, T), x.dtype),
        grid_spec=pltpu.PrefetchScalarGridSpec(
            num_scalar_prefetch=0,
            grid=(B, n_t),
            in_specs=[
                pl.BlockSpec((Bt, C, Tt), lambda b, t: (b, 0, t)),
                pl.BlockSpec((Bt, C, 1), lambda b, t: (b, 0, 0)),
            ],
            out_specs=pl.BlockSpec((Bt, C, Tt), lambda b, t: (b, 0, t)),
        ),
        compiler_params=pltpu.CompilerParams(
            dimension_semantics=("parallel", "parallel"),
            vmem_limit_bytes=int(vmem_limit_bytes),
        ),
        cost_estimate=pl.CostEstimate(
            flops=B * C * T,
            transcendentals=0,
            bytes_accessed=2 * B * C * T * itemsize + B * C * 4,
        ),
    )(x, gate)
    return out


def se_module_ref(x, w1, b1, w2, b2):
    # Pure-JAX reference mirroring the PyTorch forward.
    s = jnp.mean(x, axis=-1, keepdims=True)                          # (B, C, 1)
    h = jnp.einsum("bct,oc->bot", s, w1[:, :, 0]) + b1[None, :, None]
    h = jnp.maximum(h, 0.0)
    g = jnp.einsum("bot,co->bct", h, w2[:, :, 0]) + b2[None, :, None]
    return x * jax.nn.sigmoid(g)


if __name__ == "__main__":
    key = jax.random.PRNGKey(0)

    def make_params(k, C, BN):
        k_w1, k_b1, k_w2, k_b2 = jax.random.split(k, 4)
        bound1 = 1.0 / np.sqrt(C)
        w1 = jax.random.uniform(k_w1, (BN, C, 1), jnp.float32, -bound1, bound1)
        b1 = jax.random.uniform(k_b1, (BN,), jnp.float32, -bound1, bound1)
        bound2 = 1.0 / np.sqrt(BN)
        w2 = jax.random.uniform(k_w2, (C, BN, 1), jnp.float32, -bound2, bound2)
        b2 = jax.random.uniform(k_b2, (C,), jnp.float32, -bound2, bound2)
        return w1, b1, w2, b2

    k_x, k_p, k_x2, k_p2, k_x3, k_p3 = jax.random.split(key, 6)

    # Test 1: fused single-pass path, lane-aligned T.
    B, C, T, BN = 2, 16, 128, 32
    x = jax.random.normal(k_x, (B, C, T), dtype=jnp.float32)
    w1, b1, w2, b2 = make_params(k_p, C, BN)
    out = jax.block_until_ready(se_module(x, w1, b1, w2, b2))
    ref = se_module_ref(x, w1, b1, w2, b2)
    np.testing.assert_allclose(np.asarray(out), np.asarray(ref), rtol=1e-5, atol=1e-5)

    # Test 2: fused path with ragged T (full-extent last block dim, no padding).
    B2, C2, T2, BN2 = 3, 24, 200, 32
    x2 = jax.random.normal(k_x2, (B2, C2, T2), dtype=jnp.float32)
    w1b, b1b, w2b, b2b = make_params(k_p2, C2, BN2)
    out2 = jax.block_until_ready(se_module(x2, w1b, b1b, w2b, b2b))
    ref2 = se_module_ref(x2, w1b, b1b, w2b, b2b)
    np.testing.assert_allclose(np.asarray(out2), np.asarray(ref2), rtol=1e-5, atol=1e-5)

    # Test 3: two-pass reduce-then-scale path with a ragged (iota-masked) T
    # tail; a tiny slab target forces the T-tiled structure at small shapes.
    B3, C3, T3, BN3 = 3, 24, 200, 32
    x3 = jax.random.normal(k_x3, (B3, C3, T3), dtype=jnp.float32)
    w1c, b1c, w2c, b2c = make_params(k_p3, C3, BN3)
    out3 = jax.block_until_ready(
        se_module(x3, w1c, b1c, w2c, b2c, slab_target_bytes=8 * 1024))
    ref3 = se_module_ref(x3, w1c, b1c, w2c, b2c)
    np.testing.assert_allclose(np.asarray(out3), np.asarray(ref3), rtol=1e-5, atol=1e-5)

    print("KERNEL_OK")
</pallas_src>

<mosaic_0001>
module attributes {stable_mosaic.version = 11 : i64} {
  func.func @_se_fused_kernel(%arg0: i32, %arg1: memref<1x16x128xf32, #tpu.memory_space<vmem>>, %arg2: memref<16x32xf32, #tpu.memory_space<vmem>>, %arg3: memref<1x32xf32, #tpu.memory_space<vmem>>, %arg4: memref<32x16xf32, #tpu.memory_space<vmem>>, %arg5: memref<1x16xf32, #tpu.memory_space<vmem>>, %arg6: memref<1x16x128xf32, #tpu.memory_space<vmem>>) attributes {dimension_semantics = [#tpu.dimension_semantics<parallel>], iteration_bounds = array<i64: 2>, scalar_prefetch = 0 : i64, scratch_operands = 0 : i64, tpu.core_type = #tpu.core_type<tc>, window_params = [{transform_indices = @transform_0, window_bounds = array<i64: 1, 16, 128>}, {pipeline_mode = #tpu.pipeline_mode<synchronous>, transform_indices = @transform_1, window_bounds = array<i64: 16, 32>}, {pipeline_mode = #tpu.pipeline_mode<synchronous>, transform_indices = @transform_2, window_bounds = array<i64: 1, 32>}, {pipeline_mode = #tpu.pipeline_mode<synchronous>, transform_indices = @transform_3, window_bounds = array<i64: 32, 16>}, {pipeline_mode = #tpu.pipeline_mode<synchronous>, transform_indices = @transform_4, window_bounds = array<i64: 1, 16>}, {transform_indices = @transform_5, window_bounds = array<i64: 1, 16, 128>}]} {
    %c0 = arith.constant 0 : index
    %c0_0 = arith.constant 0 : index
    %c0_1 = arith.constant 0 : index
    %0 = vector.load %arg1[%c0, %c0_0, %c0_1] : memref<1x16x128xf32, #tpu.memory_space<vmem>>, vector<1x16x128xf32>
    %cst = arith.constant dense<0.000000e+00> : vector<1x16xf32>
    %1 = vector.multi_reduction <add>, %0, %cst [2] : vector<1x16x128xf32> to vector<1x16xf32>
    %cst_2 = arith.constant 7.812500e-03 : f32
    %2 = vector.broadcast %cst_2 : f32 to vector<1x16xf32>
    %3 = arith.mulf %1, %2 : vector<1x16xf32>
    %c0_3 = arith.constant 0 : index
    %c0_4 = arith.constant 0 : index
    %4 = vector.load %arg2[%c0_3, %c0_4] : memref<16x32xf32, #tpu.memory_space<vmem>>, vector<16x32xf32>
    %cst_5 = arith.constant dense<0.000000e+00> : vector<1x32xf32>
    %5 = tpu.matmul %3, %4, %cst_5 {dimension_numbers = #tpu.dot_dimension_numbers<[1], [0], [0], [1], [0, 0, 1, 1], [], []>} : vector<1x16xf32>, vector<16x32xf32>, vector<1x32xf32> -> vector<1x32xf32>
    %c0_6 = arith.constant 0 : index
    %c0_7 = arith.constant 0 : index
    %6 = vector.load %arg3[%c0_6, %c0_7] : memref<1x32xf32, #tpu.memory_space<vmem>>, vector<1x32xf32>
    %7 = arith.addf %5, %6 : vector<1x32xf32>
    %cst_8 = arith.constant 0.000000e+00 : f32
    %8 = vector.broadcast %cst_8 : f32 to vector<1x32xf32>
    %9 = arith.maximumf %7, %8 : vector<1x32xf32>
    %c0_9 = arith.constant 0 : index
    %c0_10 = arith.constant 0 : index
    %10 = vector.load %arg4[%c0_9, %c0_10] : memref<32x16xf32, #tpu.memory_space<vmem>>, vector<32x16xf32>
    %cst_11 = arith.constant dense<0.000000e+00> : vector<1x16xf32>
    %11 = tpu.matmul %9, %10, %cst_11 {dimension_numbers = #tpu.dot_dimension_numbers<[1], [0], [0], [1], [0, 0, 1, 1], [], []>} : vector<1x32xf32>, vector<32x16xf32>, vector<1x16xf32> -> vector<1x16xf32>
    %c0_12 = arith.constant 0 : index
    %c0_13 = arith.constant 0 : index
    %12 = vector.load %arg5[%c0_12, %c0_13] : memref<1x16xf32, #tpu.memory_space<vmem>>, vector<1x16xf32>
    %13 = arith.addf %11, %12 : vector<1x16xf32>
    %14 = arith.negf %13 : vector<1x16xf32>
    %15 = math.exp %14 : vector<1x16xf32>
    %cst_14 = arith.constant 1.000000e+00 : f32
    %16 = vector.broadcast %cst_14 : f32 to vector<1x16xf32>
    %17 = arith.addf %16, %15 : vector<1x16xf32>
    %18 = arith.divf %16, %17 : vector<1x16xf32>
    %19 = vector.shape_cast %18 : vector<1x16xf32> to vector<1x16x1xf32>
    %c0_15 = arith.constant 0 : index
    %c0_16 = arith.constant 0 : index
    %c0_17 = arith.constant 0 : index
    %20 = vector.load %arg1[%c0_15, %c0_16, %c0_17] : memref<1x16x128xf32, #tpu.memory_space<vmem>>, vector<1x16x128xf32>
    %21 = vector.broadcast %19 : vector<1x16x1xf32> to vector<1x16x128xf32>
    %22 = arith.mulf %20, %21 : vector<1x16x128xf32>
    %c0_18 = arith.constant 0 : index
    %c0_19 = arith.constant 0 : index
    %c0_20 = arith.constant 0 : index
    %23 = vector.load %arg6[%c0_18, %c0_19, %c0_20] : memref<1x16x128xf32, #tpu.memory_space<vmem>>, vector<1x16x128xf32>
    tpu.vector_store %arg6[%c0_18, %c0_19, %c0_20], %22 {strides = array<i32>} : memref<1x16x128xf32, #tpu.memory_space<vmem>>, vector<1x16x128xf32>,
    return
  }
  func.func @transform_0(%arg0: i32) -> (i32, i32, i32) {
    %c0_i32 = arith.constant 0 : i32
    %c0_i32_0 = arith.constant 0 : i32
    %c0_i32_1 = arith.constant 0 : i32
    return %arg0, %c0_i32, %c0_i32_0 : i32, i32, i32
  }
  func.func @transform_1(%arg0: i32) -> (i32, i32) {
    %c0_i32 = arith.constant 0 : i32
    %c0_i32_0 = arith.constant 0 : i32
    %c0_i32_1 = arith.constant 0 : i32
    return %c0_i32, %c0_i32_0 : i32, i32
  }
  func.func @transform_2(%arg0: i32) -> (i32, i32) {
    %c0_i32 = arith.constant 0 : i32
    %c0_i32_0 = arith.constant 0 : i32
    %c0_i32_1 = arith.constant 0 : i32
    return %c0_i32, %c0_i32_0 : i32, i32
  }
  func.func @transform_3(%arg0: i32) -> (i32, i32) {
    %c0_i32 = arith.constant 0 : i32
    %c0_i32_0 = arith.constant 0 : i32
    %c0_i32_1 = arith.constant 0 : i32
    return %c0_i32, %c0_i32_0 : i32, i32
  }
  func.func @transform_4(%arg0: i32) -> (i32, i32) {
    %c0_i32 = arith.constant 0 : i32
    %c0_i32_0 = arith.constant 0 : i32
    %c0_i32_1 = arith.constant 0 : i32
    return %c0_i32, %c0_i32_0 : i32, i32
  }
  func.func @transform_5(%arg0: i32) -> (i32, i32, i32) {
    %c0_i32 = arith.constant 0 : i32
    %c0_i32_0 = arith.constant 0 : i32
    %c0_i32_1 = arith.constant 0 : i32
    return %arg0, %c0_i32, %c0_i32_0 : i32, i32, i32
  }
}

</mosaic_0001>

<llo_original>
// kernel: tpu_custom_call.1
$region0: #{tpu_custom_call.1}
  #allocation0 [shape = 'u32[]', space=smem, size = 0x4, offset = 0x4, fixed_abs, tag = 'smem constant byte address 0x4 - core index']
  #allocation1 [shape = 'u32[144,128]{1,0:T(1,128)}', space=vmem, size = 0x12000, scoped, tag = 'internal scratch']
  %s0 = inlined_call_operand.hbm [shape: f32[2,16,128], index: 0, kind: input, shape index: {}]
  %s1 = inlined_call_operand.hbm [shape: f32[16,32], index: 1, kind: input, shape index: {}]
  %s2 = inlined_call_operand.hbm [shape: f32[1,32], index: 2, kind: input, shape index: {}]
  %s3 = inlined_call_operand.hbm [shape: f32[32,16], index: 3, kind: input, shape index: {}]
  %s4 = inlined_call_operand.hbm [shape: f32[1,16], index: 4, kind: input, shape index: {}]
  %s5 = inlined_call_operand.hbm [shape: f32[2,16,128], index: 5, kind: output, shape index: {}]
  %s6 = sld [smem:[#allocation0]]
  $region73: #{tpu_custom_call.1} parent=0
    _
  %s8 = ssub.s32 1, %s6
  %s9 = scalar_select 0, %s8, %s6
  $region1: #{tpu_custom_call.1} parent=0
    #allocation2 [shape = 'u8[16384]{0}', space=vmem, size = 0x4000, scoped, tag = 'input window, operand 0']
    #allocation3 [shape = 's32[2]{0}', space=sflag, size = 0x8, scoped, tag = 'scoped memory for tpu_custom_call.1']
    #allocation4 [shape = 's32[2]{0}', space=sflag, size = 0x8, scoped, tag = 'scoped memory for tpu_custom_call.1']
    #allocation5 [shape = 'u8[8192]{0}', space=vmem, size = 0x2000, scoped, tag = 'input window, operand 1, single buffered']
    #allocation6 [shape = 's32[1]{0}', space=sflag, size = 0x4, scoped, tag = 'scoped memory for tpu_custom_call.1']
    #allocation7 [shape = 'u8[512]{0}', space=vmem, size = 0x400, scoped, tag = 'input window, operand 2, single buffered']
    #allocation8 [shape = 'u8[16384]{0}', space=vmem, size = 0x4000, scoped, tag = 'input window, operand 3, single buffered']
    #allocation9 [shape = 's32[1]{0}', space=sflag, size = 0x4, scoped, tag = 'scoped memory for tpu_custom_call.1']
    #allocation10 [shape = 'u8[512]{0}', space=vmem, size = 0x400, scoped, tag = 'input window, operand 4, single buffered']
    #allocation11 [shape = 'u8[16384]{0}', space=vmem, size = 0x4000, scoped, tag = 'output window, operand 0']
    %10 = vsyncpa [#allocation3], 0
    %s11 = scalar_lea.sflag [#allocation3], 1
    %12 = vsyncpa %s11, 0
    %13 = vsyncpa [#allocation6], 0
    %14 = vsyncpa [#allocation9], 0
    %15 = vsyncpa [#allocation4], 0
    %s16 = scalar_lea.sflag [#allocation4], 1
    %17 = vsyncpa %s16, 0
    loop: start=0, step=1, limit=4
    $region2: #{tpu_custom_call.1} parent=1 // loop_pre_header
      _
    $region3: #{tpu_custom_call.1} parent=1 // loop_header
      %s19 = sphi 0, %s23
      %p20 = scmp.ge.s32.totalorder %s19, 4
      %s29 = sphi 0, %s31
      %s32 = sphi 0, %s29
      %s33 = sphi 0, %s32
      %s49 = sphi 0, %s33
      %s53 = sphi 0, %s53
      %s55 = sphi 0, %s53
      %s56 = sphi 0, %s55
      %s70 = sphi 0, %s56
      %s74 = sphi 0, %s74
      %s76 = sphi 0, %s74
      %s77 = sphi 0, %s76
      %s91 = sphi 0, %s77
      %s95 = sphi 0, %s95
      %s97 = sphi 0, %s95
      %s98 = sphi 0, %s97
      %s112 = sphi 0, %s98
      %s116 = sphi 0, %s116
      %s118 = sphi 0, %s116
      %s119 = sphi 0, %s118
      %s133 = sphi 0, %s119
      %s139 = sphi 0, %s141
      %s142 = sphi 0, %s139
      %s143 = sphi 0, %s142
      %s159 = sphi 0, %s143
    $region4: #{tpu_custom_call.1} parent=1 // loop_header_branch
      %22 = sbr.rel (%p20) target = $region8
    $region5: #{tpu_custom_call.1} parent=1 // loop_body
      %s24 = ssub.s32 %s19, 1
      %s25 = ssub.s32 %s19, 2
      %s26 = sadd.s32 %s19, 1
      %s27 = ssub.s32 %s19, %s26
      %p28 = scmp.eq.s32.totalorder %s27, 0
      %s30 = sadd.s32 %s29, 1
      %s31 = scalar_select %p28, %s29, %s30
      %p34 = pneg %p28
      %p35 = scmp.eq.s32.totalorder %s19, 1
      %p36 = por %p34, %p35
      %p37 = scmp.ne.s32.totalorder %s29, %s32
      %p38 = scmp.eq.s32.totalorder %s19, 0
      %p39 = por %p37, %p38
      %p40 = scmp.ne.s32.totalorder %s29, %s32
      %p41 = scmp.eq.s32.totalorder %s24, 1
      %p42 = por %p40, %p41
      %p43 = scmp.ne.s32.totalorder %s32, %s33
      %p44 = scmp.eq.s32.totalorder %s24, 0
      %p45 = por %p43, %p44
      %p46 = scmp.ne.s32.totalorder %s32, %s33
      %p47 = scmp.eq.s32.totalorder %s25, 1
      %p48 = por %p46, %p47
      %p50 = scmp.ne.s32.totalorder %s33, %s49
      %p51 = scmp.eq.s32.totalorder %s25, 0
      %p52 = por %p50, %p51
      %s54 = sadd.s32 %s53, 1
      %p57 = scmp.eq.s32.totalorder %s19, 1
      %p58 = scmp.ne.s32.totalorder %s53, %s55
      %p59 = scmp.eq.s32.totalorder %s19, 0
      %p60 = por %p58, %p59
      %p61 = scmp.ne.s32.totalorder %s53, %s55
      %p62 = scmp.eq.s32.totalorder %s24, 1
      %p63 = por %p61, %p62
      %p64 = scmp.ne.s32.totalorder %s55, %s56
      %p65 = scmp.eq.s32.totalorder %s24, 0
      %p66 = por %p64, %p65
      %p67 = scmp.ne.s32.totalorder %s55, %s56
      %p68 = scmp.eq.s32.totalorder %s25, 1
      %p69 = por %p67, %p68
      %p71 = scmp.ne.s32.totalorder %s56, %s70
      %p72 = scmp.eq.s32.totalorder %s25, 0
      %p73 = por %p71, %p72
      %s75 = sadd.s32 %s74, 1
      %p78 = scmp.eq.s32.totalorder %s19, 1
      %p79 = scmp.ne.s32.totalorder %s74, %s76
      %p80 = scmp.eq.s32.totalorder %s19, 0
      %p81 = por %p79, %p80
      %p82 = scmp.ne.s32.totalorder %s74, %s76
      %p83 = scmp.eq.s32.totalorder %s24, 1
      %p84 = por %p82, %p83
      %p85 = scmp.ne.s32.totalorder %s76, %s77
      %p86 = scmp.eq.s32.totalorder %s24, 0
      %p87 = por %p85, %p86
      %p88 = scmp.ne.s32.totalorder %s76, %s77
      %p89 = scmp.eq.s32.totalorder %s25, 1
      %p90 = por %p88, %p89
      %p92 = scmp.ne.s32.totalorder %s77, %s91
      %p93 = scmp.eq.s32.totalorder %s25, 0
      %p94 = por %p92, %p93
      %s96 = sadd.s32 %s95, 1
      %p99 = scmp.eq.s32.totalorder %s19, 1
      %p100 = scmp.ne.s32.totalorder %s95, %s97
      %p101 = scmp.eq.s32.totalorder %s19, 0
      %p102 = por %p100, %p101
      %p103 = scmp.ne.s32.totalorder %s95, %s97
      %p104 = scmp.eq.s32.totalorder %s24, 1
      %p105 = por %p103, %p104
      %p106 = scmp.ne.s32.totalorder %s97, %s98
      %p107 = scmp.eq.s32.totalorder %s24, 0
      %p108 = por %p106, %p107
      %p109 = scmp.ne.s32.totalorder %s97, %s98
      %p110 = scmp.eq.s32.totalorder %s25, 1
      %p111 = por %p109, %p110
      %p113 = scmp.ne.s32.totalorder %s98, %s112
      %p114 = scmp.eq.s32.totalorder %s25, 0
      %p115 = por %p113, %p114
      %s117 = sadd.s32 %s116, 1
      %p120 = scmp.eq.s32.totalorder %s19, 1
      %p121 = scmp.ne.s32.totalorder %s116, %s118
      %p122 = scmp.eq.s32.totalorder %s19, 0
      %p123 = por %p121, %p122
      %p124 = scmp.ne.s32.totalorder %s116, %s118
      %p125 = scmp.eq.s32.totalorder %s24, 1
      %p126 = por %p124, %p125
      %p127 = scmp.ne.s32.totalorder %s118, %s119
      %p128 = scmp.eq.s32.totalorder %s24, 0
      %p129 = por %p127, %p128
      %p130 = scmp.ne.s32.totalorder %s118, %s119
      %p131 = scmp.eq.s32.totalorder %s25, 1
      %p132 = por %p130, %p131
      %p134 = scmp.ne.s32.totalorder %s119, %s133
      %p135 = scmp.eq.s32.totalorder %s25, 0
      %p136 = por %p134, %p135
      %s137 = ssub.s32 %s19, %s26
      %p138 = scmp.eq.s32.totalorder %s137, 0
      %s140 = sadd.s32 %s139, 1
      %s141 = scalar_select %p138, %s139, %s140
      %p144 = pneg %p138
      %p145 = scmp.eq.s32.totalorder %s19, 1
      %p146 = por %p144, %p145
      %p147 = scmp.ne.s32.totalorder %s139, %s142
      %p148 = scmp.eq.s32.totalorder %s19, 0
      %p149 = por %p147, %p148
      %p150 = scmp.ne.s32.totalorder %s139, %s142
      %p151 = scmp.eq.s32.totalorder %s24, 1
      %p152 = por %p150, %p151
      %p153 = scmp.ne.s32.totalorder %s142, %s143
      %p154 = scmp.eq.s32.totalorder %s24, 0
      %p155 = por %p153, %p154
      %p156 = scmp.ne.s32.totalorder %s142, %s143
      %p157 = scmp.eq.s32.totalorder %s25, 1
      %p158 = por %p156, %p157
      %p160 = scmp.ne.s32.totalorder %s143, %s159
      %p161 = scmp.eq.s32.totalorder %s25, 0
      %p162 = por %p160, %p161
      %p163 = scmp.le.s32.totalorder 1, %s19
      %p164 = scmp.lt.s32.totalorder %s19, 3
      %p165 = pnand %p163, %p164
      %p166 = pneg %p165
      // Predicated region
      $region9: #{tpu_custom_call.1} parent=5 // pred_check
        _
      $region10: #{tpu_custom_call.1} parent=5 // pred_check_branch
        %168 = sbr.rel (%p165) target = $region12
      $region11: #{tpu_custom_call.1} parent=5 // pred_region
        %s169 = ssub.s32 %s19, 1
        // Predicated region
        $region13: #{tpu_custom_call.1} parent=11 // pred_check
          %p170 = pneg %p66
        $region14: #{tpu_custom_call.1} parent=11 // pred_check_branch
          %172 = sbr.rel (%p170) target = $region16
        $region15: #{tpu_custom_call.1} parent=11 // pred_region
          %s174 = ssub.s32 256, 256
          %175 = vsyncadd [#allocation6], %s174
          %s176 = sshll.u32 [#allocation5], 4
          %s177 = int_to_ptr.vmem [resolvable:$true] %s176
          %182 = dma.hbm_to_vmem [thread:$0]  %s1, 256, %s177, [#allocation6], 128, 128, 8
        $region16: #{tpu_custom_call.1} parent=11 // pred_fallthru
          _
        // Predicated region
        $region17: #{tpu_custom_call.1} parent=11 // pred_check
          %p183 = pneg %p87
        $region18: #{tpu_custom_call.1} parent=11 // pred_check_branch
          %185 = sbr.rel (%p183) target = $region20
        $region19: #{tpu_custom_call.1} parent=11 // pred_region
          %s187 = ssub.s32 16, 16
          %188 = vsyncadd [#allocation6], %s187
          %s190 = sshll.u32 [#allocation7], 4
          %s191 = int_to_ptr.vmem [resolvable:$true] %s190
          %193 = dma.hbm_to_vmem [thread:$0]  %s2, 16, %s191, [#allocation6]
        $region20: #{tpu_custom_call.1} parent=11 // pred_fallthru
          _
        // Predicated region
        $region21: #{tpu_custom_call.1} parent=11 // pred_check
          %p194 = pneg %p108
        $region22: #{tpu_custom_call.1} parent=11 // pred_check_branch
          %196 = sbr.rel (%p194) target = $region24
        $region23: #{tpu_custom_call.1} parent=11 // pred_region
          %s198 = ssub.s32 512, 512
          %199 = vsyncadd [#allocation9], %s198
          %s200 = sshll.u32 [#allocation8], 4
          %s201 = int_to_ptr.vmem [resolvable:$true] %s200
          %206 = dma.hbm_to_vmem [thread:$0]  %s3, 512, %s201, [#allocation9], 128, 128, 8
        $region24: #{tpu_custom_call.1} parent=11 // pred_fallthru
          _
        // Predicated region
        $region25: #{tpu_custom_call.1} parent=11 // pred_check
          %p207 = pneg %p129
        $region26: #{tpu_custom_call.1} parent=11 // pred_check_branch
          %209 = sbr.rel (%p207) target = $region28
        $region27: #{tpu_custom_call.1} parent=11 // pred_region
          %s211 = ssub.s32 16, 16
          %212 = vsyncadd [#allocation9], %s211
          %s214 = sshll.u32 [#allocation10], 4
          %s215 = int_to_ptr.vmem [resolvable:$true] %s214
          %217 = dma.hbm_to_vmem [thread:$0]  %s4, 16, %s215, [#allocation9]
        $region28: #{tpu_custom_call.1} parent=11 // pred_fallthru
          _
      $region12: #{tpu_custom_call.1} parent=5 // pred_fallthru
        _
      %p218 = scmp.lt.s32.totalorder %s19, 2
      // Predicated region
      $region29: #{tpu_custom_call.1} parent=5 // pred_check
        %p219 = pneg %p218
      $region30: #{tpu_custom_call.1} parent=5 // pred_check_branch
        %221 = sbr.rel (%p219) target = $region32
      $region31: #{tpu_custom_call.1} parent=5 // pred_region
        // Predicated region
        $region33: #{tpu_custom_call.1} parent=31 // pred_check
          %p222 = pneg %p39
        $region34: #{tpu_custom_call.1} parent=31 // pred_check_branch
          %224 = sbr.rel (%p222) target = $region36
        $region35: #{tpu_custom_call.1} parent=31 // pred_region
          %s225 = sand.u32 %s29, 1
          %s226 = scalar_lea.sflag [#allocation3], %s225
          %s227 = sand.u32 %s29, 1
          %s228 = smul.addr %s227, 16
          %s229 = scalar_lea.vmem [#allocation2], %s228
          %s231 = ssub.s32 256, 256
          %232 = vsyncadd %s226, %s231
          %s233 = smul.addr %s19, 2
          %s234 = smul.addr %s233, 128
          %s235 = scalar_lea.hbm %s0, %s234
          %s236 = sshll.u32 %s229, 4
          %s237 = int_to_ptr.vmem [resolvable:$true] %s236
          %242 = dma.hbm_to_vmem [thread:$0]  %s235, 256, %s237, %s226, 128, 128, 8
        $region36: #{tpu_custom_call.1} parent=31 // pred_fallthru
          _
      $region32: #{tpu_custom_call.1} parent=5 // pred_fallthru
        _
      %p243 = scmp.le.s32.totalorder 1, %s19
      %p244 = scmp.lt.s32.totalorder %s19, 3
      %p245 = pnand %p243, %p244
      %p246 = pneg %p245
      // Predicated region
      $region37: #{tpu_custom_call.1} parent=5 // pred_check
        _
      $region38: #{tpu_custom_call.1} parent=5 // pred_check_branch
        %248 = sbr.rel (%p245) target = $region40
      $region39: #{tpu_custom_call.1} parent=5 // pred_region
        %s249 = ssub.s32 %s19, 1
        %s250 = sand.u32 %s32, 1
        %s251 = scalar_lea.sflag [#allocation3], %s250
        %s252 = sand.u32 %s32, 1
        %s253 = smul.addr %s252, 16
        %s254 = scalar_lea.vmem [#allocation2], %s253
        // Predicated region
        $region41: #{tpu_custom_call.1} parent=39 // pred_check
          %p255 = pneg %p45
        $region42: #{tpu_custom_call.1} parent=39 // pred_check_branch
          %257 = sbr.rel (%p255) target = $region44
        $region43: #{tpu_custom_call.1} parent=39 // pred_region
          %258 = dma.done %s251, 256
        $region44: #{tpu_custom_call.1} parent=39 // pred_fallthru
          _
        // Predicated region
        $region45: #{tpu_custom_call.1} parent=39 // pred_check
          %p259 = pneg %p66
        $region46: #{tpu_custom_call.1} parent=39 // pred_check_branch
          %261 = sbr.rel (%p259) target = $region48
        $region47: #{tpu_custom_call.1} parent=39 // pred_region
          %262 = dma.done [#allocation6], 256
        $region48: #{tpu_custom_call.1} parent=39 // pred_fallthru
          _
        // Predicated region
        $region49: #{tpu_custom_call.1} parent=39 // pred_check
          %p263 = pneg %p87
        $region50: #{tpu_custom_call.1} parent=39 // pred_check_branch
          %265 = sbr.rel (%p263) target = $region52
        $region51: #{tpu_custom_call.1} parent=39 // pred_region
          %266 = dma.done [#allocation6], 16
        $region52: #{tpu_custom_call.1} parent=39 // pred_fallthru
          _
        // Predicated region
        $region53: #{tpu_custom_call.1} parent=39 // pred_check
          %p267 = pneg %p108
        $region54: #{tpu_custom_call.1} parent=39 // pred_check_branch
          %269 = sbr.rel (%p267) target = $region56
        $region55: #{tpu_custom_call.1} parent=39 // pred_region
          %270 = dma.done [#allocation9], 512
        $region56: #{tpu_custom_call.1} parent=39 // pred_fallthru
          _
        // Predicated region
        $region57: #{tpu_custom_call.1} parent=39 // pred_check
          %p271 = pneg %p129
        $region58: #{tpu_custom_call.1} parent=39 // pred_check_branch
          %273 = sbr.rel (%p271) target = $region60
        $region59: #{tpu_custom_call.1} parent=39 // pred_region
          %274 = dma.done [#allocation9], 16
        $region60: #{tpu_custom_call.1} parent=39 // pred_fallthru
          _
        %s275 = sand.u32 %s32, 1
        %s276 = scalar_lea.sflag [#allocation3], %s275
        %s277 = sand.u32 %s32, 1
        %s278 = smul.addr %s277, 16
        %s279 = scalar_lea.vmem [#allocation2], %s278
        %p280 = pneg %p45
        %p281 = pneg %p42
        %p282 = pneg %p66
        %p283 = pneg %p63
        %p284 = pneg %p87
        %p285 = pneg %p84
        %p286 = pneg %p108
        %p287 = pneg %p105
        %p288 = pneg %p129
        %p289 = pneg %p126
        %p290 = pneg %p155
        %p291 = pneg %p152
        %s292 = sand.u32 %s142, 1
        %s293 = scalar_lea.sflag [#allocation4], %s292
        %s294 = sand.u32 %s142, 1
        %s295 = smul.addr %s294, 16
        %s296 = scalar_lea.vmem [#allocation11], %s295
        %v297 = vld [vmem:[%s254] sm:$0xff]
        %v298 = vld [vmem:[%s254 + $0x8] sm:$0xff]
        %299 = vadd.xlane.f32.xlu0 %v297
        %v300 = vpop.xlane.xlu0 %299
        %301 = vadd.xlane.f32.xlu0 %v298
        %v302 = vpop.xlane.xlu0 %301
        %v303 = vmul.f32 %v300, 0.0078125
        %v304 = vmul.f32 %v302, 0.0078125
        %v305 = vld [vmem:[#allocation5] sm:$0xff]
        %v306 = vld [vmem:[#allocation5 + $0x8] sm:$0xff]
        %v307 = vld [vmem:[#allocation7] sm:$0x1]
        %v310 = vlaneseq
        %v311 = vand.u32 %v310, 127
        %v312 = vlaneseq
        %v313 = vshrl.u32 %v312, 7
        %v314 = vsub.s32 %v311, %v313
        %v315 = vrot.slane %v303, %v314
        %v316 = vadd.s32 %v311, 4294967288
        %v317 = vlaneseq
        %v318 = vshrl.u32 %v317, 7
        %v319 = vsub.s32 %v316, %v318
        %v320 = vrot.slane %v304, %v319
        %vm321 = vcmask 130112
        %v322 = vsel %vm321, %v320, %v315
        %vm323 = vcmask 130048
        %v324 = vsel %vm323, %v322, 0
        %326 = vmatprep.subr.mxu0 0.0
        %327 = vmatpush1.msra.mxu0 %v305
        %328 = vmatprep.subr.mxu0 0.0
        %329 = vmatpush1.msra.mxu0 %v306
        %330 = vmatprep.subr.mxu0 0.0
        %331 = vmatpush1.msra.mxu0 0.0
        %332 = vmatprep.subr.mxu0 0.0
        %333 = vmatpush1.msra.mxu0 0.0
        %334 = vmatprep.subr.mxu0 0.0
        %335 = vmatpush1.msra.mxu0 0.0
        %336 = vmatprep.subr.mxu0 0.0
        %337 = vmatpush1.msra.mxu0 0.0
        %338 = vmatprep.subr.mxu0 0.0
        %339 = vmatpush1.msra.mxu0 0.0
        %340 = vmatprep.subr.mxu0 0.0
        %341 = vmatpush1.msra.mxu0 0.0
        %342 = vmatprep.subr.mxu0 0.0
        %343 = vmatpush1.msra.mxu0 0.0
        %344 = vmatprep.subr.mxu0 0.0
        %345 = vmatpush1.msra.mxu0 0.0
        %346 = vmatprep.subr.mxu0 0.0
        %347 = vmatpush1.msra.mxu0 0.0
        %348 = vmatprep.subr.mxu0 0.0
        %349 = vmatpush1.msra.mxu0 0.0
        %350 = vmatprep.subr.mxu0 0.0
        %351 = vmatpush1.msra.mxu0 0.0
        %352 = vmatprep.subr.mxu0 0.0
        %353 = vmatpush1.msra.mxu0 0.0
        %354 = vmatprep.subr.mxu0 0.0
        %355 = vmatpush1.msra.mxu0 0.0
        %356 = vmatprep.subr.mxu0 0.0
        %357 = vmatpush1.msra.mxu0 0.0
        %358 = vmatprep.subr.mxu0 0.0
        %359 = vmatpush1.msra.mxu0 0.0
        %360 = vmatprep.subr.mxu0 0.0
        %361 = vmatpush1.msra.mxu0 0.0
        %362 = vmatprep.subr.mxu0 0.0
        %363 = vmatpush1.msra.mxu0 0.0
        %364 = vmatprep.subr.mxu0 0.0
        %365 = vmatpush1.msra.mxu0 0.0
        %366 = vmatprep.subr.mxu0 0.0
        %367 = vmatpush1.msra.mxu0 0.0
        %368 = vmatprep.subr.mxu0 0.0
        %369 = vmatpush1.msra.mxu0 0.0
        %370 = vmatprep.subr.mxu0 0.0
        %371 = vmatpush1.msra.mxu0 0.0
        %372 = vmatprep.subr.mxu0 0.0
        %373 = vmatpush1.msra.mxu0 0.0
        %374 = vmatprep.subr.mxu0 0.0
        %375 = vmatpush1.msra.mxu0 0.0
        %376 = vmatprep.subr.mxu0 0.0
        %377 = vmatpush1.msra.mxu0 0.0
        %378 = vmatprep.subr.mxu0 0.0
        %379 = vmatpush1.msra.mxu0 0.0
        %380 = vmatprep.subr.mxu0 0.0
        %381 = vmatpush1.msra.mxu0 0.0
        %382 = vmatprep.subr.mxu0 0.0
        %383 = vmatpush1.msra.mxu0 0.0
        %384 = vmatprep.subr.mxu0 0.0
        %385 = vmatpush1.msra.mxu0 0.0
        %386 = vmatprep.subr.mxu0 0.0
        %387 = vmatpush1.msra.mxu0 0.0
        %388 = vmatprep.subr.mxu0 0.0
        %389 = vmatpush1.msra.mxu0 0.0
        %390 = vmatprep.mubr.f32.mxu0 0.0
        %391 = vmatmul.mubr.f32.gmra.mrb[0].mxu0 %v324
        %v392 = vpop.f32.mrb[0].mxu0
        %v393 = vadd.f32 %v307, %v392
        %v394 = vpop.f32.mrb[0].mxu0
        %395 = vdwg.mxu0
        %v396 = vmax.f32 %v393, 0.0
        %v397 = vld [vmem:[#allocation8] sm:$0xff]
        %v398 = vld [vmem:[#allocation8 + $0x8] sm:$0xff]
        %v399 = vld [vmem:[#allocation8 + $0x10] sm:$0xff]
        %v400 = vld [vmem:[#allocation8 + $0x18] sm:$0xff]
        %v401 = vld [vmem:[#allocation10] sm:$0x1]
        %vm402 = vcmask 261120
        %v404 = vsel %vm402, %v396, 0
        %406 = vmatprep.subr.mxu0 0.0
        %407 = vmatpush1.msra.mxu0 %v397
        %408 = vmatprep.subr.mxu0 0.0
        %409 = vmatpush1.msra.mxu0 %v398
        %410 = vmatprep.subr.mxu0 0.0
        %411 = vmatpush1.msra.mxu0 %v399
        %412 = vmatprep.subr.mxu0 0.0
        %413 = vmatpush1.msra.mxu0 %v400
        %414 = vmatprep.subr.mxu0 0.0
        %415 = vmatpush1.msra.mxu0 0.0
        %416 = vmatprep.subr.mxu0 0.0
        %417 = vmatpush1.msra.mxu0 0.0
        %418 = vmatprep.subr.mxu0 0.0
        %419 = vmatpush1.msra.mxu0 0.0
        %420 = vmatprep.subr.mxu0 0.0
        %421 = vmatpush1.msra.mxu0 0.0
        %422 = vmatprep.subr.mxu0 0.0
        %423 = vmatpush1.msra.mxu0 0.0
        %424 = vmatprep.subr.mxu0 0.0
        %425 = vmatpush1.msra.mxu0 0.0
        %426 = vmatprep.subr.mxu0 0.0
        %427 = vmatpush1.msra.mxu0 0.0
        %428 = vmatprep.subr.mxu0 0.0
        %429 = vmatpush1.msra.mxu0 0.0
        %430 = vmatprep.subr.mxu0 0.0
        %431 = vmatpush1.msra.mxu0 0.0
        %432 = vmatprep.subr.mxu0 0.0
        %433 = vmatpush1.msra.mxu0 0.0
        %434 = vmatprep.subr.mxu0 0.0
        %435 = vmatpush1.msra.mxu0 0.0
        %436 = vmatprep.subr.mxu0 0.0
        %437 = vmatpush1.msra.mxu0 0.0
        %438 = vmatprep.subr.mxu0 0.0
        %439 = vmatpush1.msra.mxu0 0.0
        %440 = vmatprep.subr.mxu0 0.0
        %441 = vmatpush1.msra.mxu0 0.0
        %442 = vmatprep.subr.mxu0 0.0
        %443 = vmatpush1.msra.mxu0 0.0
        %444 = vmatprep.subr.mxu0 0.0
        %445 = vmatpush1.msra.mxu0 0.0
        %446 = vmatprep.subr.mxu0 0.0
        %447 = vmatpush1.msra.mxu0 0.0
        %448 = vmatprep.subr.mxu0 0.0
        %449 = vmatpush1.msra.mxu0 0.0
        %450 = vmatprep.subr.mxu0 0.0
        %451 = vmatpush1.msra.mxu0 0.0
        %452 = vmatprep.subr.mxu0 0.0
        %453 = vmatpush1.msra.mxu0 0.0
        %454 = vmatprep.subr.mxu0 0.0
        %455 = vmatpush1.msra.mxu0 0.0
        %456 = vmatprep.subr.mxu0 0.0
        %457 = vmatpush1.msra.mxu0 0.0
        %458 = vmatprep.subr.mxu0 0.0
        %459 = vmatpush1.msra.mxu0 0.0
        %460 = vmatprep.subr.mxu0 0.0
        %461 = vmatpush1.msra.mxu0 0.0
        %462 = vmatprep.subr.mxu0 0.0
        %463 = vmatpush1.msra.mxu0 0.0
        %464 = vmatprep.subr.mxu0 0.0
        %465 = vmatpush1.msra.mxu0 0.0
        %466 = vmatprep.subr.mxu0 0.0
        %467 = vmatpush1.msra.mxu0 0.0
        %468 = vmatprep.subr.mxu0 0.0
        %469 = vmatpush1.msra.mxu0 0.0
        %470 = vmatprep.mubr.f32.mxu0 0.0
        %471 = vmatmul.mubr.f32.gmra.mrb[0].mxu0 %v404
        %v472 = vpop.f32.mrb[0].mxu0
        %v473 = vadd.f32 %v401, %v472
        %v474 = vpop.f32.mrb[0].mxu0
        %475 = vdwg.mxu0
        %v476 = vxor.u32 %v473, 2147483648
        %v477 = vmul.f32 %v476, 1.442695
        %v478 = vpow.pop %v477
        %v479 = vadd.f32 %v478, 1.0
        %v480 = vrcp.pop %v479
        %v481 = vmul.f32 1.0, %v480
        %v482 = vlaneseq
        %v483 = vshrl.u32 %v482, 7
        %v484 = vsub.s32 0, %v483
        %v485 = vrot.slane %v481, %v484
        %487 = vbcast.lane.b32.xlu0 %v485, 256
        %v488 = vpop.permute.xlu0 %487
        %s490 = sor.u32 256, 8
        %491 = vbcast.lane.b32.xlu0 %v485, %s490
        %v492 = vpop.permute.xlu0 %491
        %v493 = vmul.f32 %v297, %v488
        %v494 = vmul.f32 %v298, %v492
        %495 = vst [vmem:[%s296] sm:$0xff] %v493
        %496 = vst [vmem:[%s296 + $0x8] sm:$0xff] %v494
        %s497 = sand.u32 %s142, 1
        %s498 = scalar_lea.sflag [#allocation4], %s497
        %s499 = sand.u32 %s142, 1
        %s500 = smul.addr %s499, 16
        %s501 = scalar_lea.vmem [#allocation11], %s500
        // Predicated region
        $region61: #{tpu_custom_call.1} parent=39 // pred_check
          %p502 = pneg %p152
        $region62: #{tpu_custom_call.1} parent=39 // pred_check_branch
          %504 = sbr.rel (%p502) target = $region64
        $region63: #{tpu_custom_call.1} parent=39 // pred_region
          %s506 = ssub.s32 256, 256
          %507 = vsyncadd %s498, %s506
          %s508 = smul.addr %s24, 2
          %s509 = smul.addr %s508, 128
          %s510 = scalar_lea.hbm %s5, %s509
          %s511 = sshll.u32 %s501, 4
          %s512 = int_to_ptr.vmem [resolvable:$true] %s511
          %517 = dma.vmem_to_hbm [thread:$0]  %s512, 256, %s510, %s498, 128, 128, 8
        $region64: #{tpu_custom_call.1} parent=39 // pred_fallthru
          _
      $region40: #{tpu_custom_call.1} parent=5 // pred_fallthru
        _
      %p518 = scmp.le.s32.totalorder 2, %s19
      // Predicated region
      $region65: #{tpu_custom_call.1} parent=5 // pred_check
        %p519 = pneg %p518
      $region66: #{tpu_custom_call.1} parent=5 // pred_check_branch
        %521 = sbr.rel (%p519) target = $region68
      $region67: #{tpu_custom_call.1} parent=5 // pred_region
        %s522 = ssub.s32 %s19, 2
        // Predicated region
        $region69: #{tpu_custom_call.1} parent=67 // pred_check
          %p523 = pneg %p158
        $region70: #{tpu_custom_call.1} parent=67 // pred_check_branch
          %525 = sbr.rel (%p523) target = $region72
        $region71: #{tpu_custom_call.1} parent=67 // pred_region
          %s526 = sand.u32 %s143, 1
          %s527 = scalar_lea.sflag [#allocation4], %s526
          %s528 = sand.u32 %s143, 1
          %s529 = smul.addr %s528, 16
          %s530 = scalar_lea.vmem [#allocation11], %s529
          %531 = dma.done %s527, 256
        $region72: #{tpu_custom_call.1} parent=67 // pred_fallthru
          _
      $region68: #{tpu_custom_call.1} parent=5 // pred_fallthru
        _
    $region6: #{tpu_custom_call.1} parent=1 // loop_footer
      %s23 = sadd.s32 1, %s19
    $region7: #{tpu_custom_call.1} parent=1 // loop_footer_branch
      %18 = sbr.rel target = $region3
    $region8: #{tpu_custom_call.1} parent=1 // loop_exit
      _
    %532 = vsyncpa [#allocation3], 1
    %s533 = scalar_lea.sflag [#allocation3], 1
    %534 = vsyncpa %s533, 1
    %535 = vsyncpa [#allocation6], 1
    %536 = vsyncpa [#allocation9], 1
    %537 = vsyncpa [#allocation4], 1
    %s538 = scalar_lea.sflag [#allocation4], 1
    %539 = vsyncpa %s538, 1

</llo_original>
